<compile_context>
chip_gen: v6e
topology: v6e:2x2x1
jax: 0.10.0
libtpu: 0.0.40
codegen_flags: <defaults>
</compile_context>

<pallas_src>
import jax
import jax.numpy as jnp
from jax.experimental import pallas as pl
from jax.experimental.pallas import tpu as pltpu


def _round_up(x: int, m: int) -> int:
    return (x + m - 1) // m * m


def _linear_kernel(x_ref, w_ref, o_ref):
    # One MXU pass per (batch-tile, dim-tile). K lives fully inside the block,
    # so there is no cross-step accumulator / pl.when needed.
    o_ref[...] = jnp.dot(
        x_ref[...], w_ref[...], preferred_element_type=jnp.float32
    ).astype(o_ref.dtype)


def continuous_embedding(x: jax.Array, w_t: jax.Array) -> jax.Array:
    """Equivalent to F.linear(x, w) with w_t = w.T (no bias).

    x:   (..., num_continuous)
    w_t: (num_continuous, dim)
    out: (..., dim)
    """
    *lead, num_continuous = x.shape
    k, dim = w_t.shape
    assert k == num_continuous

    # NOTE: for genuinely tiny shapes (K ~ 4, dim ~ 32, batch < ~100) plain
    # jnp.dot fused by XLA beats any custom kernel; this Pallas path is meant
    # for batch / dim in the hundreds+. We keep the kernel as the requested
    # implementation of the module's forward pass.

    x2 = x.reshape(-1, num_continuous)
    batch = x2.shape[0]
    dtype = x2.dtype

    # --- host-side padding for clean TPU layouts ------------------------------
    kp = _round_up(num_continuous, 8)    # sublane-clean K (padded rows multiply by zero)
    dp = _round_up(dim, 128)             # lane-dense output stores (no vst.msk)
    b8 = _round_up(batch, 8)
    tm = min(512, b8)                    # batch tile (b8 % 8 == 0  =>  tm % 8 == 0)
    bp = _round_up(batch, tm)            # every batch block is full
    # dim tile: largest of {512, 256, 128} that divides the padded dim.
    tn = 512 if dp % 512 == 0 else (256 if dp % 256 == 0 else 128)

    x_p = jnp.zeros((bp, kp), dtype=dtype).at[:batch, :num_continuous].set(x2)
    w_p = jnp.zeros((kp, dp), dtype=w_t.dtype).at[:num_continuous, :dim].set(w_t)

    # VMEM budget: 2 buffers per operand (double-buffered pipeline) + headroom,
    # clamped so it stays well within v7x's 64 MiB physical VMEM.
    itemsize = jnp.dtype(dtype).itemsize
    tile_bytes = 2 * (tm * kp + kp * tn + tm * tn) * itemsize
    vmem_limit = int(min(32 * 2**20, max(4 * 2**20, 3 * tile_bytes)))

    grid = (bp // tm, dp // tn)

    out_p = pl.pallas_call(
        _linear_kernel,
        out_shape=jax.ShapeDtypeStruct((bp, dp), dtype),
        grid_spec=pltpu.PrefetchScalarGridSpec(
            num_scalar_prefetch=0,
            grid=grid,
            in_specs=[
                pl.BlockSpec((tm, kp), lambda i, j: (i, 0)),   # batch tile of x
                pl.BlockSpec((kp, tn), lambda i, j: (0, j)),   # weight column tile (resident over i)
            ],
            out_specs=pl.BlockSpec((tm, tn), lambda i, j: (i, j)),
        ),
        compiler_params=pltpu.CompilerParams(
            dimension_semantics=("parallel", "parallel"),
            vmem_limit_bytes=vmem_limit,
        ),
    )(x_p, w_p)

    out = out_p[:batch, :dim]
    return out.reshape(*lead, dim)


if __name__ == "__main__":
    num_continuous = 4
    dim = 32
    batch = 8

    key = jax.random.PRNGKey(0)
    k_x, k_w = jax.random.split(key)

    # PyTorch stores weight as (dim, num_continuous); we keep its transpose
    # for a layout-friendly x @ W^T matmul.
    w = jax.random.uniform(
        k_w, (dim, num_continuous), dtype=jnp.float32,
        minval=-(num_continuous ** -0.5), maxval=(num_continuous ** -0.5),
    )
    w_t = w.T  # (num_continuous, dim)

    x = jax.random.normal(k_x, (batch, num_continuous), dtype=jnp.float32)

    out = continuous_embedding(x, w_t)
    out = jax.block_until_ready(out)

    # Reference check against plain JAX (same semantics as F.linear(x, w)).
    ref = x @ w_t
    assert out.shape == (batch, dim)
    assert jnp.allclose(out, ref, atol=1e-5, rtol=1e-5)

    print("KERNEL_OK")
</pallas_src>

<mosaic_0001>
module attributes {stable_mosaic.version = 11 : i64} {
  func.func @_linear_kernel(%arg0: i32, %arg1: i32, %arg2: memref<8x8xf32, #tpu.memory_space<vmem>>, %arg3: memref<8x128xf32, #tpu.memory_space<vmem>>, %arg4: memref<8x128xf32, #tpu.memory_space<vmem>>) attributes {dimension_semantics = [#tpu.dimension_semantics<parallel>, #tpu.dimension_semantics<parallel>], iteration_bounds = array<i64: 1, 1>, scalar_prefetch = 0 : i64, scratch_operands = 0 : i64, tpu.core_type = #tpu.core_type<tc>, window_params = [{transform_indices = @transform_0, window_bounds = array<i64: 8, 8>}, {transform_indices = @transform_1, window_bounds = array<i64: 8, 128>}, {transform_indices = @transform_2, window_bounds = array<i64: 8, 128>}]} {
    %c0 = arith.constant 0 : index
    %c0_0 = arith.constant 0 : index
    %0 = vector.load %arg2[%c0, %c0_0] : memref<8x8xf32, #tpu.memory_space<vmem>>, vector<8x8xf32>
    %c0_1 = arith.constant 0 : index
    %c0_2 = arith.constant 0 : index
    %1 = vector.load %arg3[%c0_1, %c0_2] : memref<8x128xf32, #tpu.memory_space<vmem>>, vector<8x128xf32>
    %cst = arith.constant dense<0.000000e+00> : vector<8x128xf32>
    %2 = tpu.matmul %0, %1, %cst {dimension_numbers = #tpu.dot_dimension_numbers<[1], [0], [0], [1], [0, 0, 1, 1], [], []>} : vector<8x8xf32>, vector<8x128xf32>, vector<8x128xf32> -> vector<8x128xf32>
    %c0_3 = arith.constant 0 : index
    %c0_4 = arith.constant 0 : index
    %3 = vector.load %arg4[%c0_3, %c0_4] : memref<8x128xf32, #tpu.memory_space<vmem>>, vector<8x128xf32>
    tpu.vector_store %arg4[%c0_3, %c0_4], %2 {strides = array<i32>} : memref<8x128xf32, #tpu.memory_space<vmem>>, vector<8x128xf32>,
    return
  }
  func.func @transform_0(%arg0: i32, %arg1: i32) -> (i32, i32) {
    %c0_i32 = arith.constant 0 : i32
    %c0_i32_0 = arith.constant 0 : i32
    return %arg0, %c0_i32 : i32, i32
  }
  func.func @transform_1(%arg0: i32, %arg1: i32) -> (i32, i32) {
    %c0_i32 = arith.constant 0 : i32
    %c0_i32_0 = arith.constant 0 : i32
    return %c0_i32, %arg1 : i32, i32
  }
  func.func @transform_2(%arg0: i32, %arg1: i32) -> (i32, i32) {
    %c0_i32 = arith.constant 0 : i32
    return %arg0, %arg1 : i32, i32
  }
}

</mosaic_0001>

<llo_original>
// kernel: tpu_custom_call.1
$region0: #{tpu_custom_call.1}
  #allocation0 [shape = 'u32[]', space=smem, size = 0x4, offset = 0x4, fixed_abs, tag = 'smem constant byte address 0x4 - core index']
  #allocation1 [shape = 'u32[144,128]{1,0:T(1,128)}', space=vmem, size = 0x12000, scoped, tag = 'internal scratch']
  %s0 = inlined_call_operand.hbm [shape: f32[8,8], index: 0, kind: input, shape index: {}]
  %s1 = inlined_call_operand.hbm [shape: f32[8,128], index: 1, kind: input, shape index: {}]
  %s2 = inlined_call_operand.hbm [shape: f32[8,128], index: 2, kind: output, shape index: {}]
  %s3 = sld [smem:[#allocation0]]
  $region26: #{tpu_custom_call.1} parent=0
    _
  %s5 = ssub.s32 1, %s3
  %s6 = scalar_select 0, %s5, %s3
  $region1: #{tpu_custom_call.1} parent=0
    #allocation2 [shape = 'u8[4096]{0}', space=vmem, size = 0x1000, scoped, tag = 'input window, operand 0, single buffered']
    #allocation3 [shape = 's32[1]{0}', space=sflag, size = 0x4, scoped, tag = 'scoped memory for tpu_custom_call.1']
    #allocation4 [shape = 's32[1]{0}', space=sflag, size = 0x4, scoped, tag = 'scoped memory for tpu_custom_call.1']
    #allocation5 [shape = 'u8[4096]{0}', space=vmem, size = 0x1000, scoped, tag = 'input window, operand 1, single buffered']
    #allocation6 [shape = 's32[1]{0}', space=sflag, size = 0x4, scoped, tag = 'scoped memory for tpu_custom_call.1']
    #allocation7 [shape = 'u8[4096]{0}', space=vmem, size = 0x1000, scoped, tag = 'output window, operand 0, single buffered']
    %7 = vsyncpa [#allocation3], 0
    %8 = vsyncpa [#allocation6], 0
    %9 = vsyncpa [#allocation4], 0
    // Predicated region
    $region2: #{tpu_custom_call.1} parent=1 // pred_check
      _
    $region3: #{tpu_custom_call.1} parent=1 // pred_check_branch
      %11 = sbr.rel (0) target = $region5
    $region4: #{tpu_custom_call.1} parent=1 // pred_region
      %s13 = ssub.s32 128, 128
      %14 = vsyncadd [#allocation3], %s13
      %s16 = sshll.u32 [#allocation2], 4
      %s17 = int_to_ptr.vmem [resolvable:$true] %s16
      %19 = dma.hbm_to_vmem [thread:$0]  %s0, 128, %s17, [#allocation3]
    $region5: #{tpu_custom_call.1} parent=1 // pred_fallthru
      _
    // Predicated region
    $region6: #{tpu_custom_call.1} parent=1 // pred_check
      _
    $region7: #{tpu_custom_call.1} parent=1 // pred_check_branch
      %21 = sbr.rel (0) target = $region9
    $region8: #{tpu_custom_call.1} parent=1 // pred_region
      %s23 = ssub.s32 128, 128
      %24 = vsyncadd [#allocation6], %s23
      %s26 = sshll.u32 [#allocation5], 4
      %s27 = int_to_ptr.vmem [resolvable:$true] %s26
      %29 = dma.hbm_to_vmem [thread:$0]  %s1, 128, %s27, [#allocation6]
    $region9: #{tpu_custom_call.1} parent=1 // pred_fallthru
      _
    // Predicated region
    $region10: #{tpu_custom_call.1} parent=1 // pred_check
      _
    $region11: #{tpu_custom_call.1} parent=1 // pred_check_branch
      %31 = sbr.rel (0) target = $region13
    $region12: #{tpu_custom_call.1} parent=1 // pred_region
      %32 = dma.done [#allocation3], 128
    $region13: #{tpu_custom_call.1} parent=1 // pred_fallthru
      _
    // Predicated region
    $region14: #{tpu_custom_call.1} parent=1 // pred_check
      _
    $region15: #{tpu_custom_call.1} parent=1 // pred_check_branch
      %34 = sbr.rel (0) target = $region17
    $region16: #{tpu_custom_call.1} parent=1 // pred_region
      %35 = dma.done [#allocation6], 128
    $region17: #{tpu_custom_call.1} parent=1 // pred_fallthru
      _
    %v36 = vld [vmem:[#allocation2] sm:$0xff]
    %v37 = vld [vmem:[#allocation5] sm:$0xff]
    %vm38 = vcmask 64512
    %v40 = vsel %vm38, %v36, 0
    %42 = vmatprep.subr.mxu0 0.0
    %43 = vmatpush1.msra.mxu0 0.0
    %44 = vmatprep.subr.mxu0 0.0
    %45 = vmatpush1.msra.mxu0 0.0
    %46 = vmatprep.subr.mxu0 0.0
    %47 = vmatpush1.msra.mxu0 0.0
    %48 = vmatprep.subr.mxu0 0.0
    %49 = vmatpush1.msra.mxu0 0.0
    %50 = vmatprep.subr.mxu0 0.0
    %51 = vmatpush1.msra.mxu0 0.0
    %52 = vmatprep.subr.mxu0 0.0
    %53 = vmatpush1.msra.mxu0 0.0
    %54 = vmatprep.subr.mxu0 0.0
    %55 = vmatpush1.msra.mxu0 0.0
    %56 = vmatprep.subr.mxu0 0.0
    %57 = vmatpush1.msra.mxu0 0.0
    %58 = vmatprep.subr.mxu0 0.0
    %59 = vmatpush1.msra.mxu0 0.0
    %60 = vmatprep.subr.mxu0 0.0
    %61 = vmatpush1.msra.mxu0 0.0
    %62 = vmatprep.subr.mxu0 0.0
    %63 = vmatpush1.msra.mxu0 0.0
    %64 = vmatprep.subr.mxu0 0.0
    %65 = vmatpush1.msra.mxu0 0.0
    %66 = vmatprep.subr.mxu0 0.0
    %67 = vmatpush1.msra.mxu0 0.0
    %68 = vmatprep.subr.mxu0 0.0
    %69 = vmatpush1.msra.mxu0 0.0
    %70 = vmatprep.subr.mxu0 0.0
    %71 = vmatpush1.msra.mxu0 0.0
    %72 = vmatprep.subr.mxu0 0.0
    %73 = vmatpush1.msra.mxu0 %v37
    %74 = vmatprep.subr.mxu0 0.0
    %75 = vmatpush2.msra.mxu0 0.0
    %76 = vmatprep.subr.mxu0 0.0
    %77 = vmatpush2.msra.mxu0 0.0
    %78 = vmatprep.subr.mxu0 0.0
    %79 = vmatpush2.msra.mxu0 0.0
    %80 = vmatprep.subr.mxu0 0.0
    %81 = vmatpush2.msra.mxu0 0.0
    %82 = vmatprep.subr.mxu0 0.0
    %83 = vmatpush2.msra.mxu0 0.0
    %84 = vmatprep.subr.mxu0 0.0
    %85 = vmatpush2.msra.mxu0 0.0
    %86 = vmatprep.subr.mxu0 0.0
    %87 = vmatpush2.msra.mxu0 0.0
    %88 = vmatprep.subr.mxu0 0.0
    %89 = vmatpush2.msra.mxu0 0.0
    %90 = vmatprep.subr.mxu0 0.0
    %91 = vmatpush2.msra.mxu0 0.0
    %92 = vmatprep.subr.mxu0 0.0
    %93 = vmatpush2.msra.mxu0 0.0
    %94 = vmatprep.subr.mxu0 0.0
    %95 = vmatpush2.msra.mxu0 0.0
    %96 = vmatprep.subr.mxu0 0.0
    %97 = vmatpush2.msra.mxu0 0.0
    %98 = vmatprep.subr.mxu0 0.0
    %99 = vmatpush2.msra.mxu0 0.0
    %100 = vmatprep.subr.mxu0 0.0
    %101 = vmatpush2.msra.mxu0 0.0
    %102 = vmatprep.subr.mxu0 0.0
    %103 = vmatpush2.msra.mxu0 0.0
    %104 = vmatprep.subr.mxu0 0.0
    %105 = vmatpush2.msra.mxu0 0.0
    %106 = vmatprep.mubr.f32.mxu0 0.0
    %107 = vmatmul.mubr.f32.gmra.mxu0 %v40
    %v108 = vpop.f32.mrf.mxu0
    %v109 = vadd.f32 0.0, %v108
    %v110 = vpop.f32.mrf.mxu0
    %111 = vdwg.mxu0
    %112 = vst [vmem:[#allocation7] sm:$0xff] %v109
    // Predicated region
    $region18: #{tpu_custom_call.1} parent=1 // pred_check
      _
    $region19: #{tpu_custom_call.1} parent=1 // pred_check_branch
      %114 = sbr.rel (0) target = $region21
    $region20: #{tpu_custom_call.1} parent=1 // pred_region
      %s116 = ssub.s32 128, 128
      %117 = vsyncadd [#allocation4], %s116
      %s119 = sshll.u32 [#allocation7], 4
      %s120 = int_to_ptr.vmem [resolvable:$true] %s119
      %122 = dma.vmem_to_hbm [thread:$0]  %s120, 128, %s2, [#allocation4]
    $region21: #{tpu_custom_call.1} parent=1 // pred_fallthru
      _
    // Predicated region
    $region22: #{tpu_custom_call.1} parent=1 // pred_check
      _
    $region23: #{tpu_custom_call.1} parent=1 // pred_check_branch
      %124 = sbr.rel (0) target = $region25
    $region24: #{tpu_custom_call.1} parent=1 // pred_region
      %125 = dma.done [#allocation4], 128
    $region25: #{tpu_custom_call.1} parent=1 // pred_fallthru
      _
    %126 = vsyncpa [#allocation3], 1
    %127 = vsyncpa [#allocation6], 1
    %128 = vsyncpa [#allocation4], 1

</llo_original>
